<compile_context>
chip_gen: v6e
topology: v6e:2x2x1
jax: 0.10.0
libtpu: 0.0.40
codegen_flags: <defaults>
</compile_context>

<pallas_src>
import functools

import jax
import jax.numpy as jnp
from jax.experimental import pallas as pl
from jax.experimental.pallas import tpu as pltpu


def _round_up(x, m):
    return ((x + m - 1) // m) * m


def _fused_mlp_kernel(*refs, num_layers):
    """refs = (x_ref, w0_ref, ..., wL_ref, out_ref).

    x_ref : (TB, Din_p)   bf16 tile of the (padded) flattened input
    wi_ref: (in_p_i, out_p_i) bf16 padded transposed weights (VMEM-resident)
    out_ref:(TB, Dout_p)  f32 padded logits tile
    Hidden activations never leave the chip.
    """
    x_ref = refs[0]
    w_refs = refs[1:1 + num_layers + 1]
    o_ref = refs[1 + num_layers + 1]

    h = x_ref[...]                                        # bf16
    for i in range(num_layers):                           # static unroll
        acc = jnp.dot(h, w_refs[i][...],
                      preferred_element_type=jnp.float32)
        h = jnp.maximum(acc, 0.0).astype(jnp.bfloat16)    # ReLU
    logits = jnp.dot(h, w_refs[num_layers][...],
                     preferred_element_type=jnp.float32)
    o_ref[...] = logits.astype(o_ref.dtype)


def fused_mlp_forward(x_pad, weights_pad, num_layers, *, batch_tile,
                      vmem_limit_bytes):
    """x_pad: [Bp, Din_p] bf16 (Bp % batch_tile == 0, Din_p % 128 == 0).
    weights_pad: list of num_layers+1 bf16 arrays [in_p_i, out_p_i].
    Returns padded f32 logits [Bp, Dout_p_last]."""
    Bp, Din_p = x_pad.shape
    Dout_p = weights_pad[-1].shape[1]
    grid = (Bp // batch_tile,)

    in_specs = [pl.BlockSpec((batch_tile, Din_p), lambda b: (b, 0))]
    for w in weights_pad:
        din, dout = w.shape
        # Full-array weight block with a constant block index: stays resident
        # across batch tiles (no per-tile re-DMA).
        in_specs.append(pl.BlockSpec((din, dout), lambda b: (0, 0)))
    out_spec = pl.BlockSpec((batch_tile, Dout_p), lambda b: (b, 0))

    flops = 2 * Bp * sum(w.shape[0] * w.shape[1] for w in weights_pad)
    bytes_accessed = (x_pad.size * 2
                      + sum(w.size * 2 for w in weights_pad)
                      + Bp * Dout_p * 4)

    return pl.pallas_call(
        functools.partial(_fused_mlp_kernel, num_layers=num_layers),
        out_shape=jax.ShapeDtypeStruct((Bp, Dout_p), jnp.float32),
        grid=grid,
        in_specs=in_specs,
        out_specs=out_spec,
        compiler_params=pltpu.CompilerParams(
            dimension_semantics=("parallel",),
            vmem_limit_bytes=vmem_limit_bytes),
        cost_estimate=pl.CostEstimate(
            flops=flops, transcendentals=0, bytes_accessed=bytes_accessed),
    )(x_pad, *weights_pad)


class FCCNetworkPallas:
    """JAX/Pallas re-implementation of FCCNetwork's forward pass.

    use_bias defaults to False (matching the PyTorch module's default).
    """

    def __init__(self, input_shape, num_output_classes, num_filters,
                 num_layers, use_bias=False, key=None):
        assert not use_bias, "use_bias=False is the module default used here"
        # TODO(synk): bias path omitted (module is instantiated with use_bias=False)
        self.input_shape = tuple(input_shape)
        self.num_layers = num_layers
        if isinstance(num_filters, int):
            num_filters = [num_filters] * num_layers
        self.num_filters = list(num_filters)
        self.num_output_classes = num_output_classes

        if key is None:
            key = jax.random.PRNGKey(42)

        flat_in = 1
        for d in self.input_shape[1:]:
            flat_in *= d
        self.flat_in = flat_in

        feat_sizes = ([flat_in] + list(self.num_filters[:num_layers])
                      + [num_output_classes])

        self.weights_t = []    # unpadded transposed bf16 weights [in, out]
        self.weights_pad = []  # padded bf16 weights [in_p, out_p]
        for i in range(num_layers + 1):
            key, sub = jax.random.split(key)
            in_feat, out_feat = feat_sizes[i], feat_sizes[i + 1]
            # PyTorch default Linear init ~ U(-1/sqrt(in), 1/sqrt(in))
            bound = 1.0 / float(in_feat) ** 0.5
            w = jax.random.uniform(sub, (out_feat, in_feat),
                                   minval=-bound, maxval=bound,
                                   dtype=jnp.float32)
            w_t = jnp.transpose(w).astype(jnp.bfloat16)          # [in, out]
            self.weights_t.append(w_t)
            in_p = _round_up(in_feat, 128)
            out_p = _round_up(out_feat, 128)
            w_pad = jnp.pad(w_t, ((0, in_p - in_feat), (0, out_p - out_feat)))
            self.weights_pad.append(w_pad)

        self.in0_pad = self.weights_pad[0].shape[0]
        self.out_pad = self.weights_pad[-1].shape[1]
        self.weight_bytes = sum(int(w.size) * 2 for w in self.weights_pad)

        # One jitted wrapper per (batch, input-rest) shape; fuses the pad /
        # flatten / slice glue with the pallas_call.
        self._jit_forward = jax.jit(self._forward_impl,
                                    static_argnames=("B", "Bp", "batch_tile",
                                                     "vmem_limit"))

    # ---- tiling policy -------------------------------------------------
    def _pick_tiling(self, B):
        """Pick (Bp, batch_tile, vmem_limit_bytes) for a batch of B rows."""
        def footprint(tile):
            # double-buffered input tile + output tile + resident weights
            return (self.weight_bytes
                    + 2 * tile * self.in0_pad * 2
                    + 2 * tile * self.out_pad * 4)

        budget = 48 * 1024 * 1024  # conservative VMEM budget
        if B <= 256:
            batch_tile = _round_up(B, 8)
            Bp = batch_tile
        else:
            batch_tile = 128
            for cand in (512, 256, 128):
                if footprint(cand) <= budget:
                    batch_tile = cand
                    break
            Bp = _round_up(B, batch_tile)

        vmem_limit = int(min(64 * 1024 * 1024,
                             max(32 * 1024 * 1024,
                                 int(footprint(batch_tile) * 1.25))))
        return Bp, batch_tile, vmem_limit

    # ---- forward -------------------------------------------------------
    def _forward_impl(self, x, *, B, Bp, batch_tile, vmem_limit):
        flat = x.reshape(B, -1).astype(jnp.bfloat16)
        x_pad = jnp.pad(flat, ((0, Bp - B), (0, self.in0_pad - flat.shape[1])))
        logits_pad = fused_mlp_forward(
            x_pad, self.weights_pad, self.num_layers,
            batch_tile=batch_tile, vmem_limit_bytes=vmem_limit)
        return logits_pad[:B, :self.num_output_classes]

    def forward(self, x):
        B = x.shape[0]
        Bp, batch_tile, vmem_limit = self._pick_tiling(B)
        return self._jit_forward(x, B=B, Bp=Bp, batch_tile=batch_tile,
                                 vmem_limit=vmem_limit)

    __call__ = forward


if __name__ == "__main__":
    key = jax.random.PRNGKey(0)

    # Small shapes consistent with the module: NCHW image-like input.
    B, C, H, W = 2, 4, 16, 16
    num_filters = [32, 32]
    num_layers = 2
    num_classes = 10

    x = jax.random.normal(key, (B, C, H, W), dtype=jnp.float32)

    net = FCCNetworkPallas(
        input_shape=(B, C, H, W),
        num_output_classes=num_classes,
        num_filters=num_filters,
        num_layers=num_layers,
        use_bias=False,
        key=jax.random.PRNGKey(1),
    )

    preds = net(x)
    preds = jax.block_until_ready(preds)
    assert preds.shape == (B, num_classes), preds.shape

    # Pure-JAX reference of the same forward pass (same bf16 weights,
    # bf16 activations, f32 accumulation) for a numerical cross-check.
    ref = x.reshape(B, -1).astype(jnp.bfloat16)
    for i in range(num_layers):
        ref = jnp.maximum(
            jnp.dot(ref, net.weights_t[i],
                    preferred_element_type=jnp.float32), 0.0
        ).astype(jnp.bfloat16)
    ref = jnp.dot(ref, net.weights_t[num_layers],
                  preferred_element_type=jnp.float32)
    ref = jax.block_until_ready(ref)

    assert jnp.allclose(preds, ref, atol=1e-2, rtol=1e-2), (
        jnp.max(jnp.abs(preds - ref)))

    print("KERNEL_OK")
</pallas_src>

<mosaic_0001>
module attributes {stable_mosaic.version = 11 : i64} {
  func.func @_fused_mlp_kernel(%arg0: i32, %arg1: memref<8x1024xbf16, #tpu.memory_space<vmem>>, %arg2: memref<1024x128xbf16, #tpu.memory_space<vmem>>, %arg3: memref<128x128xbf16, #tpu.memory_space<vmem>>, %arg4: memref<128x128xbf16, #tpu.memory_space<vmem>>, %arg5: memref<8x128xf32, #tpu.memory_space<vmem>>) attributes {dimension_semantics = [#tpu.dimension_semantics<parallel>], iteration_bounds = array<i64: 1>, scalar_prefetch = 0 : i64, scratch_operands = 0 : i64, tpu.core_type = #tpu.core_type<tc>, window_params = [{transform_indices = @transform_0, window_bounds = array<i64: 8, 1024>}, {pipeline_mode = #tpu.pipeline_mode<synchronous>, transform_indices = @transform_1, window_bounds = array<i64: 1024, 128>}, {pipeline_mode = #tpu.pipeline_mode<synchronous>, transform_indices = @transform_2, window_bounds = array<i64: 128, 128>}, {pipeline_mode = #tpu.pipeline_mode<synchronous>, transform_indices = @transform_3, window_bounds = array<i64: 128, 128>}, {transform_indices = @transform_4, window_bounds = array<i64: 8, 128>}]} {
    %c0 = arith.constant 0 : index
    %c0_0 = arith.constant 0 : index
    %0 = vector.load %arg1[%c0, %c0_0] : memref<8x1024xbf16, #tpu.memory_space<vmem>>, vector<8x1024xbf16>
    %c0_1 = arith.constant 0 : index
    %c0_2 = arith.constant 0 : index
    %1 = vector.load %arg2[%c0_1, %c0_2] : memref<1024x128xbf16, #tpu.memory_space<vmem>>, vector<1024x128xbf16>
    %cst = arith.constant dense<0.000000e+00> : vector<8x128xf32>
    %2 = tpu.matmul %0, %1, %cst {dimension_numbers = #tpu.dot_dimension_numbers<[1], [0], [0], [1], [0, 0, 1, 1], [], []>} : vector<8x1024xbf16>, vector<1024x128xbf16>, vector<8x128xf32> -> vector<8x128xf32>
    %cst_3 = arith.constant 0.000000e+00 : f32
    %3 = vector.broadcast %cst_3 : f32 to vector<8x128xf32>
    %4 = arith.maximumf %2, %3 : vector<8x128xf32>
    %5 = arith.truncf %4 : vector<8x128xf32> to vector<8x128xbf16>
    %c0_4 = arith.constant 0 : index
    %c0_5 = arith.constant 0 : index
    %6 = vector.load %arg3[%c0_4, %c0_5] : memref<128x128xbf16, #tpu.memory_space<vmem>>, vector<128x128xbf16>
    %cst_6 = arith.constant dense<0.000000e+00> : vector<8x128xf32>
    %7 = tpu.matmul %5, %6, %cst_6 {dimension_numbers = #tpu.dot_dimension_numbers<[1], [0], [0], [1], [0, 0, 1, 1], [], []>} : vector<8x128xbf16>, vector<128x128xbf16>, vector<8x128xf32> -> vector<8x128xf32>
    %cst_7 = arith.constant 0.000000e+00 : f32
    %8 = vector.broadcast %cst_7 : f32 to vector<8x128xf32>
    %9 = arith.maximumf %7, %8 : vector<8x128xf32>
    %10 = arith.truncf %9 : vector<8x128xf32> to vector<8x128xbf16>
    %c0_8 = arith.constant 0 : index
    %c0_9 = arith.constant 0 : index
    %11 = vector.load %arg4[%c0_8, %c0_9] : memref<128x128xbf16, #tpu.memory_space<vmem>>, vector<128x128xbf16>
    %cst_10 = arith.constant dense<0.000000e+00> : vector<8x128xf32>
    %12 = tpu.matmul %10, %11, %cst_10 {dimension_numbers = #tpu.dot_dimension_numbers<[1], [0], [0], [1], [0, 0, 1, 1], [], []>} : vector<8x128xbf16>, vector<128x128xbf16>, vector<8x128xf32> -> vector<8x128xf32>
    %c0_11 = arith.constant 0 : index
    %c0_12 = arith.constant 0 : index
    %13 = vector.load %arg5[%c0_11, %c0_12] : memref<8x128xf32, #tpu.memory_space<vmem>>, vector<8x128xf32>
    tpu.vector_store %arg5[%c0_11, %c0_12], %12 {strides = array<i32>} : memref<8x128xf32, #tpu.memory_space<vmem>>, vector<8x128xf32>,
    return
  }
  func.func @transform_0(%arg0: i32) -> (i32, i32) {
    %c0_i32 = arith.constant 0 : i32
    %c0_i32_0 = arith.constant 0 : i32
    return %arg0, %c0_i32 : i32, i32
  }
  func.func @transform_1(%arg0: i32) -> (i32, i32) {
    %c0_i32 = arith.constant 0 : i32
    %c0_i32_0 = arith.constant 0 : i32
    %c0_i32_1 = arith.constant 0 : i32
    return %c0_i32, %c0_i32_0 : i32, i32
  }
  func.func @transform_2(%arg0: i32) -> (i32, i32) {
    %c0_i32 = arith.constant 0 : i32
    %c0_i32_0 = arith.constant 0 : i32
    %c0_i32_1 = arith.constant 0 : i32
    return %c0_i32, %c0_i32_0 : i32, i32
  }
  func.func @transform_3(%arg0: i32) -> (i32, i32) {
    %c0_i32 = arith.constant 0 : i32
    %c0_i32_0 = arith.constant 0 : i32
    %c0_i32_1 = arith.constant 0 : i32
    return %c0_i32, %c0_i32_0 : i32, i32
  }
  func.func @transform_4(%arg0: i32) -> (i32, i32) {
    %c0_i32 = arith.constant 0 : i32
    %c0_i32_0 = arith.constant 0 : i32
    return %arg0, %c0_i32 : i32, i32
  }
}

</mosaic_0001>

<llo_original>
// kernel: _forward_impl.1
$region0: #{_forward_impl.1}
  #allocation0 [shape = 'u32[]', space=smem, size = 0x4, offset = 0x4, fixed_abs, tag = 'smem constant byte address 0x4 - core index']
  #allocation1 [shape = 'u32[144,128]{1,0:T(1,128)}', space=vmem, size = 0x12000, scoped, tag = 'internal scratch']
  %s0 = inlined_call_operand.vmem [shape: bf16[8,1024], index: 0, kind: input, shape index: {}]
  %s1 = inlined_call_operand.hbm [shape: bf16[1024,128], index: 1, kind: input, shape index: {}]
  %s2 = inlined_call_operand.vmem [shape: bf16[128,128], index: 2, kind: input, shape index: {}]
  %s3 = inlined_call_operand.vmem [shape: bf16[128,128], index: 3, kind: input, shape index: {}]
  %s4 = inlined_call_operand.vmem [shape: f32[8,128], index: 4, kind: output, shape index: {}]
  %s5 = sld [smem:[#allocation0]]
  $region30: #{_forward_impl.1} parent=0
    _
  %s7 = ssub.s32 1, %s5
  %s8 = scalar_select 0, %s7, %s5
  $region1: #{_forward_impl.1} parent=0
    #allocation2 [shape = 'u8[262144]{0}', space=vmem, size = 0x40000, scoped, tag = 'input window, operand 1, single buffered']
    #allocation3 [shape = 's32[1]{0}', space=sflag, size = 0x4, scoped, tag = 'scoped memory for _forward_impl.1']
    %9 = vsyncpa [#allocation3], 0
    // Predicated region
    $region2: #{_forward_impl.1} parent=1 // pred_check
      _
    $region3: #{_forward_impl.1} parent=1 // pred_check_branch
      %11 = sbr.rel (0) target = $region5
    $region4: #{_forward_impl.1} parent=1 // pred_region
      _
    $region5: #{_forward_impl.1} parent=1 // pred_fallthru
      _
    // Predicated region
    $region6: #{_forward_impl.1} parent=1 // pred_check
      _
    $region7: #{_forward_impl.1} parent=1 // pred_check_branch
      %13 = sbr.rel (0) target = $region9
    $region8: #{_forward_impl.1} parent=1 // pred_region
      %s15 = ssub.s32 8192, 8192
      %16 = vsyncadd [#allocation3], %s15
      %s17 = sshll.u32 [#allocation2], 4
      %s18 = int_to_ptr.vmem [resolvable:$true] %s17
      %23 = dma.hbm_to_vmem [thread:$0]  %s1, 8192, %s18, [#allocation3], 64, 64, 4
    $region9: #{_forward_impl.1} parent=1 // pred_fallthru
      _
    // Predicated region
    $region10: #{_forward_impl.1} parent=1 // pred_check
      _
    $region11: #{_forward_impl.1} parent=1 // pred_check_branch
      %25 = sbr.rel (0) target = $region13
    $region12: #{_forward_impl.1} parent=1 // pred_region
      _
    $region13: #{_forward_impl.1} parent=1 // pred_fallthru
      _
    // Predicated region
    $region14: #{_forward_impl.1} parent=1 // pred_check
      _
    $region15: #{_forward_impl.1} parent=1 // pred_check_branch
      %27 = sbr.rel (0) target = $region17
    $region16: #{_forward_impl.1} parent=1 // pred_region
      _
    $region17: #{_forward_impl.1} parent=1 // pred_fallthru
      _
    // Predicated region
    $region18: #{_forward_impl.1} parent=1 // pred_check
      _
    $region19: #{_forward_impl.1} parent=1 // pred_check_branch
      %29 = sbr.rel (0) target = $region21
    $region20: #{_forward_impl.1} parent=1 // pred_region
      %30 = dma.done [#allocation3], 8192
    $region21: #{_forward_impl.1} parent=1 // pred_fallthru
      _
    %v32 = vld [vmem:[%s0] sm:$0xff]
    %v33 = vld [vmem:[%s0 + $0x8] sm:$0xff]
    %v34 = vld [vmem:[%s0 + $0x10] sm:$0xff]
    %v35 = vld [vmem:[%s0 + $0x18] sm:$0xff]
    %v36 = vld [vmem:[#allocation2] sm:$0xf]
    %v37 = vld [vmem:[#allocation2 + $0x4] sm:$0xf]
    %v38 = vld [vmem:[#allocation2 + $0x8] sm:$0xf]
    %v39 = vld [vmem:[#allocation2 + $0xc] sm:$0xf]
    %v40 = vld [vmem:[#allocation2 + $0x10] sm:$0xf]
    %v41 = vld [vmem:[#allocation2 + $0x14] sm:$0xf]
    %v42 = vld [vmem:[#allocation2 + $0x18] sm:$0xf]
    %v43 = vld [vmem:[#allocation2 + $0x1c] sm:$0xf]
    %v44 = vld [vmem:[#allocation2 + $0x20] sm:$0xf]
    %v45 = vld [vmem:[#allocation2 + $0x24] sm:$0xf]
    %v46 = vld [vmem:[#allocation2 + $0x28] sm:$0xf]
    %v47 = vld [vmem:[#allocation2 + $0x2c] sm:$0xf]
    %v48 = vld [vmem:[#allocation2 + $0x30] sm:$0xf]
    %v49 = vld [vmem:[#allocation2 + $0x34] sm:$0xf]
    %v50 = vld [vmem:[#allocation2 + $0x38] sm:$0xf]
    %v51 = vld [vmem:[#allocation2 + $0x3c] sm:$0xf]
    %v52 = vld [vmem:[#allocation2 + $0x40] sm:$0xf]
    %v53 = vld [vmem:[#allocation2 + $0x44] sm:$0xf]
    %v54 = vld [vmem:[#allocation2 + $0x48] sm:$0xf]
    %v55 = vld [vmem:[#allocation2 + $0x4c] sm:$0xf]
    %v56 = vld [vmem:[#allocation2 + $0x50] sm:$0xf]
    %v57 = vld [vmem:[#allocation2 + $0x54] sm:$0xf]
    %v58 = vld [vmem:[#allocation2 + $0x58] sm:$0xf]
    %v59 = vld [vmem:[#allocation2 + $0x5c] sm:$0xf]
    %v60 = vld [vmem:[#allocation2 + $0x60] sm:$0xf]
    %v61 = vld [vmem:[#allocation2 + $0x64] sm:$0xf]
    %v62 = vld [vmem:[#allocation2 + $0x68] sm:$0xf]
    %v63 = vld [vmem:[#allocation2 + $0x6c] sm:$0xf]
    %v64 = vld [vmem:[#allocation2 + $0x70] sm:$0xf]
    %v65 = vld [vmem:[#allocation2 + $0x74] sm:$0xf]
    %v66 = vld [vmem:[#allocation2 + $0x78] sm:$0xf]
    %v67 = vld [vmem:[#allocation2 + $0x7c] sm:$0xf]
    %v68 = vld [vmem:[#allocation2 + $0x80] sm:$0xf]
    %v69 = vld [vmem:[#allocation2 + $0x84] sm:$0xf]
    %v70 = vld [vmem:[#allocation2 + $0x88] sm:$0xf]
    %v71 = vld [vmem:[#allocation2 + $0x8c] sm:$0xf]
    %v72 = vld [vmem:[#allocation2 + $0x90] sm:$0xf]
    %v73 = vld [vmem:[#allocation2 + $0x94] sm:$0xf]
    %v74 = vld [vmem:[#allocation2 + $0x98] sm:$0xf]
    %v75 = vld [vmem:[#allocation2 + $0x9c] sm:$0xf]
    %v76 = vld [vmem:[#allocation2 + $0xa0] sm:$0xf]
    %v77 = vld [vmem:[#allocation2 + $0xa4] sm:$0xf]
    %v78 = vld [vmem:[#allocation2 + $0xa8] sm:$0xf]
    %v79 = vld [vmem:[#allocation2 + $0xac] sm:$0xf]
    %v80 = vld [vmem:[#allocation2 + $0xb0] sm:$0xf]
    %v81 = vld [vmem:[#allocation2 + $0xb4] sm:$0xf]
    %v82 = vld [vmem:[#allocation2 + $0xb8] sm:$0xf]
    %v83 = vld [vmem:[#allocation2 + $0xbc] sm:$0xf]
    %v84 = vld [vmem:[#allocation2 + $0xc0] sm:$0xf]
    %v85 = vld [vmem:[#allocation2 + $0xc4] sm:$0xf]
    %v86 = vld [vmem:[#allocation2 + $0xc8] sm:$0xf]
    %v87 = vld [vmem:[#allocation2 + $0xcc] sm:$0xf]
    %v88 = vld [vmem:[#allocation2 + $0xd0] sm:$0xf]
    %v89 = vld [vmem:[#allocation2 + $0xd4] sm:$0xf]
    %v90 = vld [vmem:[#allocation2 + $0xd8] sm:$0xf]
    %v91 = vld [vmem:[#allocation2 + $0xdc] sm:$0xf]
    %v92 = vld [vmem:[#allocation2 + $0xe0] sm:$0xf]
    %v93 = vld [vmem:[#allocation2 + $0xe4] sm:$0xf]
    %v94 = vld [vmem:[#allocation2 + $0xe8] sm:$0xf]
    %v95 = vld [vmem:[#allocation2 + $0xec] sm:$0xf]
    %v96 = vld [vmem:[#allocation2 + $0xf0] sm:$0xf]
    %v97 = vld [vmem:[#allocation2 + $0xf4] sm:$0xf]
    %v98 = vld [vmem:[#allocation2 + $0xf8] sm:$0xf]
    %v99 = vld [vmem:[#allocation2 + $0xfc] sm:$0xf]
    %v100 = vld [vmem:[#allocation2 + $0x100] sm:$0xf]
    %v101 = vld [vmem:[#allocation2 + $0x104] sm:$0xf]
    %v102 = vld [vmem:[#allocation2 + $0x108] sm:$0xf]
    %v103 = vld [vmem:[#allocation2 + $0x10c] sm:$0xf]
    %v104 = vld [vmem:[#allocation2 + $0x110] sm:$0xf]
    %v105 = vld [vmem:[#allocation2 + $0x114] sm:$0xf]
    %v106 = vld [vmem:[#allocation2 + $0x118] sm:$0xf]
    %v107 = vld [vmem:[#allocation2 + $0x11c] sm:$0xf]
    %v108 = vld [vmem:[#allocation2 + $0x120] sm:$0xf]
    %v109 = vld [vmem:[#allocation2 + $0x124] sm:$0xf]
    %v110 = vld [vmem:[#allocation2 + $0x128] sm:$0xf]
    %v111 = vld [vmem:[#allocation2 + $0x12c] sm:$0xf]
    %v112 = vld [vmem:[#allocation2 + $0x130] sm:$0xf]
    %v113 = vld [vmem:[#allocation2 + $0x134] sm:$0xf]
    %v114 = vld [vmem:[#allocation2 + $0x138] sm:$0xf]
    %v115 = vld [vmem:[#allocation2 + $0x13c] sm:$0xf]
    %v116 = vld [vmem:[#allocation2 + $0x140] sm:$0xf]
    %v117 = vld [vmem:[#allocation2 + $0x144] sm:$0xf]
    %v118 = vld [vmem:[#allocation2 + $0x148] sm:$0xf]
    %v119 = vld [vmem:[#allocation2 + $0x14c] sm:$0xf]
    %v120 = vld [vmem:[#allocation2 + $0x150] sm:$0xf]
    %v121 = vld [vmem:[#allocation2 + $0x154] sm:$0xf]
    %v122 = vld [vmem:[#allocation2 + $0x158] sm:$0xf]
    %v123 = vld [vmem:[#allocation2 + $0x15c] sm:$0xf]
    %v124 = vld [vmem:[#allocation2 + $0x160] sm:$0xf]
    %v125 = vld [vmem:[#allocation2 + $0x164] sm:$0xf]
    %v126 = vld [vmem:[#allocation2 + $0x168] sm:$0xf]
    %v127 = vld [vmem:[#allocation2 + $0x16c] sm:$0xf]
    %v128 = vld [vmem:[#allocation2 + $0x170] sm:$0xf]
    %v129 = vld [vmem:[#allocation2 + $0x174] sm:$0xf]
    %v130 = vld [vmem:[#allocation2 + $0x178] sm:$0xf]
    %v131 = vld [vmem:[#allocation2 + $0x17c] sm:$0xf]
    %v132 = vld [vmem:[#allocation2 + $0x180] sm:$0xf]
    %v133 = vld [vmem:[#allocation2 + $0x184] sm:$0xf]
    %v134 = vld [vmem:[#allocation2 + $0x188] sm:$0xf]
    %v135 = vld [vmem:[#allocation2 + $0x18c] sm:$0xf]
    %v136 = vld [vmem:[#allocation2 + $0x190] sm:$0xf]
    %v137 = vld [vmem:[#allocation2 + $0x194] sm:$0xf]
    %v138 = vld [vmem:[#allocation2 + $0x198] sm:$0xf]
    %v139 = vld [vmem:[#allocation2 + $0x19c] sm:$0xf]
    %v140 = vld [vmem:[#allocation2 + $0x1a0] sm:$0xf]
    %v141 = vld [vmem:[#allocation2 + $0x1a4] sm:$0xf]
    %v142 = vld [vmem:[#allocation2 + $0x1a8] sm:$0xf]
    %v143 = vld [vmem:[#allocation2 + $0x1ac] sm:$0xf]
    %v144 = vld [vmem:[#allocation2 + $0x1b0] sm:$0xf]
    %v145 = vld [vmem:[#allocation2 + $0x1b4] sm:$0xf]
    %v146 = vld [vmem:[#allocation2 + $0x1b8] sm:$0xf]
    %v147 = vld [vmem:[#allocation2 + $0x1bc] sm:$0xf]
    %v148 = vld [vmem:[#allocation2 + $0x1c0] sm:$0xf]
    %v149 = vld [vmem:[#allocation2 + $0x1c4] sm:$0xf]
    %v150 = vld [vmem:[#allocation2 + $0x1c8] sm:$0xf]
    %v151 = vld [vmem:[#allocation2 + $0x1cc] sm:$0xf]
    %v152 = vld [vmem:[#allocation2 + $0x1d0] sm:$0xf]
    %v153 = vld [vmem:[#allocation2 + $0x1d4] sm:$0xf]
    %v154 = vld [vmem:[#allocation2 + $0x1d8] sm:$0xf]
    %v155 = vld [vmem:[#allocation2 + $0x1dc] sm:$0xf]
    %v156 = vld [vmem:[#allocation2 + $0x1e0] sm:$0xf]
    %v157 = vld [vmem:[#allocation2 + $0x1e4] sm:$0xf]
    %v158 = vld [vmem:[#allocation2 + $0x1e8] sm:$0xf]
    %v159 = vld [vmem:[#allocation2 + $0x1ec] sm:$0xf]
    %v160 = vld [vmem:[#allocation2 + $0x1f0] sm:$0xf]
    %v161 = vld [vmem:[#allocation2 + $0x1f4] sm:$0xf]
    %v162 = vld [vmem:[#allocation2 + $0x1f8] sm:$0xf]
    %v163 = vld [vmem:[#allocation2 + $0x1fc] sm:$0xf]
    %v168 = vunpack.c.l.b16 %v32
    %v169 = vunpack.c.h.b16 %v32
    %v170 = vunpack.c.l.b16 %v33
    %v171 = vunpack.c.h.b16 %v33
    %v172 = vunpack.c.l.b16 %v34
    %v173 = vunpack.c.h.b16 %v34
    %v174 = vunpack.c.l.b16 %v35
    %v175 = vunpack.c.h.b16 %v35
    %v176 = vpack.c.b16 %v168, %v168
    %v177 = vpack.c.b16 %v169, %v169
    %v178 = vpack.c.b16 %v170, %v170
    %v179 = vpack.c.b16 %v171, %v171
    %v180 = vpack.c.b16 %v172, %v172
    %v181 = vpack.c.b16 %v173, %v173
    %v182 = vpack.c.b16 %v174, %v174
    %v183 = vpack.c.b16 %v175, %v175
    %v320 = vunpack.c.l.b16 %v36
    %v321 = vunpack.c.l.b16 %v37
    %v322 = vunpack.c.l.b16 %v38
    %v323 = vunpack.c.l.b16 %v39
    %v324 = vunpack.c.l.b16 %v40
    %v325 = vunpack.c.l.b16 %v41
    %v326 = vunpack.c.l.b16 %v42
    %v327 = vunpack.c.l.b16 %v43
    %v328 = vunpack.c.l.b16 %v44
    %v329 = vunpack.c.l.b16 %v45
    %v330 = vunpack.c.l.b16 %v46
    %v331 = vunpack.c.l.b16 %v47
    %v332 = vunpack.c.l.b16 %v48
    %v333 = vunpack.c.l.b16 %v49
    %v334 = vunpack.c.l.b16 %v50
    %v335 = vunpack.c.l.b16 %v51
    %v336 = vunpack.c.l.b16 %v52
    %v337 = vunpack.c.l.b16 %v53
    %v338 = vunpack.c.l.b16 %v54
    %v339 = vunpack.c.l.b16 %v55
    %v340 = vunpack.c.l.b16 %v56
    %v341 = vunpack.c.l.b16 %v57
    %v342 = vunpack.c.l.b16 %v58
    %v343 = vunpack.c.l.b16 %v59
    %v344 = vunpack.c.l.b16 %v60
    %v345 = vunpack.c.l.b16 %v61
    %v346 = vunpack.c.l.b16 %v62
    %v347 = vunpack.c.l.b16 %v63
    %v348 = vunpack.c.l.b16 %v64
    %v349 = vunpack.c.l.b16 %v65
    %v350 = vunpack.c.l.b16 %v66
    %v351 = vunpack.c.l.b16 %v67
    %v352 = vunpack.c.l.b16 %v68
    %v353 = vunpack.c.l.b16 %v69
    %v354 = vunpack.c.l.b16 %v70
    %v355 = vunpack.c.l.b16 %v71
    %v356 = vunpack.c.l.b16 %v72
    %v357 = vunpack.c.l.b16 %v73
    %v358 = vunpack.c.l.b16 %v74
    %v359 = vunpack.c.l.b16 %v75
    %v360 = vunpack.c.l.b16 %v76
    %v361 = vunpack.c.l.b16 %v77
    %v362 = vunpack.c.l.b16 %v78
    %v363 = vunpack.c.l.b16 %v79
    %v364 = vunpack.c.l.b16 %v80
    %v365 = vunpack.c.l.b16 %v81
    %v366 = vunpack.c.l.b16 %v82
    %v367 = vunpack.c.l.b16 %v83
    %v368 = vunpack.c.l.b16 %v84
    %v369 = vunpack.c.l.b16 %v85
    %v370 = vunpack.c.l.b16 %v86
    %v371 = vunpack.c.l.b16 %v87
    %v372 = vunpack.c.l.b16 %v88
    %v373 = vunpack.c.l.b16 %v89
    %v374 = vunpack.c.l.b16 %v90
    %v375 = vunpack.c.l.b16 %v91
    %v376 = vunpack.c.l.b16 %v92
    %v377 = vunpack.c.l.b16 %v93
    %v378 = vunpack.c.l.b16 %v94
    %v379 = vunpack.c.l.b16 %v95
    %v380 = vunpack.c.l.b16 %v96
    %v381 = vunpack.c.l.b16 %v97
    %v382 = vunpack.c.l.b16 %v98
    %v383 = vunpack.c.l.b16 %v99
    %v384 = vunpack.c.l.b16 %v100
    %v385 = vunpack.c.l.b16 %v101
    %v386 = vunpack.c.l.b16 %v102
    %v387 = vunpack.c.l.b16 %v103
    %v388 = vunpack.c.l.b16 %v104
    %v389 = vunpack.c.l.b16 %v105
    %v390 = vunpack.c.l.b16 %v106
    %v391 = vunpack.c.l.b16 %v107
    %v392 = vunpack.c.l.b16 %v108
    %v393 = vunpack.c.l.b16 %v109
    %v394 = vunpack.c.l.b16 %v110
    %v395 = vunpack.c.l.b16 %v111
    %v396 = vunpack.c.l.b16 %v112
    %v397 = vunpack.c.l.b16 %v113
    %v398 = vunpack.c.l.b16 %v114
    %v399 = vunpack.c.l.b16 %v115
    %v400 = vunpack.c.l.b16 %v116
    %v401 = vunpack.c.l.b16 %v117
    %v402 = vunpack.c.l.b16 %v118
    %v403 = vunpack.c.l.b16 %v119
    %v404 = vunpack.c.l.b16 %v120
    %v405 = vunpack.c.l.b16 %v121
    %v406 = vunpack.c.l.b16 %v122
    %v407 = vunpack.c.l.b16 %v123
    %v408 = vunpack.c.l.b16 %v124
    %v409 = vunpack.c.l.b16 %v125
    %v410 = vunpack.c.l.b16 %v126
    %v411 = vunpack.c.l.b16 %v127
    %v412 = vunpack.c.l.b16 %v128
    %v413 = vunpack.c.l.b16 %v129
    %v414 = vunpack.c.l.b16 %v130
    %v415 = vunpack.c.l.b16 %v131
    %v416 = vunpack.c.l.b16 %v132
    %v417 = vunpack.c.l.b16 %v133
    %v418 = vunpack.c.l.b16 %v134
    %v419 = vunpack.c.l.b16 %v135
    %v420 = vunpack.c.l.b16 %v136
    %v421 = vunpack.c.l.b16 %v137
    %v422 = vunpack.c.l.b16 %v138
    %v423 = vunpack.c.l.b16 %v139
    %v424 = vunpack.c.l.b16 %v140
    %v425 = vunpack.c.l.b16 %v141
    %v426 = vunpack.c.l.b16 %v142
    %v427 = vunpack.c.l.b16 %v143
    %v428 = vunpack.c.l.b16 %v144
    %v429 = vunpack.c.l.b16 %v145
    %v430 = vunpack.c.l.b16 %v146
    %v431 = vunpack.c.l.b16 %v147
    %v432 = vunpack.c.l.b16 %v148
    %v433 = vunpack.c.l.b16 %v149
    %v434 = vunpack.c.l.b16 %v150
    %v435 = vunpack.c.l.b16 %v151
    %v436 = vunpack.c.l.b16 %v152
    %v437 = vunpack.c.l.b16 %v153
    %v438 = vunpack.c.l.b16 %v154
    %v439 = vunpack.c.l.b16 %v155
    %v440 = vunpack.c.l.b16 %v156
    %v441 = vunpack.c.l.b16 %v157
    %v442 = vunpack.c.l.b16 %v158
    %v443 = vunpack.c.l.b16 %v159
    %v444 = vunpack.c.l.b16 %v160
    %v445 = vunpack.c.l.b16 %v161
    %v446 = vunpack.c.l.b16 %v162
    %v447 = vunpack.c.l.b16 %v163
    %v448 = vpack.c.b16 %v321, %v320
    %v449 = vpack.c.b16 %v323, %v322
    %v450 = vpack.c.b16 %v325, %v324
    %v451 = vpack.c.b16 %v327, %v326
    %v452 = vpack.c.b16 %v329, %v328
    %v453 = vpack.c.b16 %v331, %v330
    %v454 = vpack.c.b16 %v333, %v332
    %v455 = vpack.c.b16 %v335, %v334
    %v456 = vpack.c.b16 %v337, %v336
    %v457 = vpack.c.b16 %v339, %v338
    %v458 = vpack.c.b16 %v341, %v340
    %v459 = vpack.c.b16 %v343, %v342
    %v460 = vpack.c.b16 %v345, %v344
    %v461 = vpack.c.b16 %v347, %v346
    %v462 = vpack.c.b16 %v349, %v348
    %v463 = vpack.c.b16 %v351, %v350
    %v464 = vpack.c.b16 %v353, %v352
    %v465 = vpack.c.b16 %v355, %v354
    %v466 = vpack.c.b16 %v357, %v356
    %v467 = vpack.c.b16 %v359, %v358
    %v468 = vpack.c.b16 %v361, %v360
    %v469 = vpack.c.b16 %v363, %v362
    %v470 = vpack.c.b16 %v365, %v364
    %v471 = vpack.c.b16 %v367, %v366
    %v472 = vpack.c.b16 %v369, %v368
    %v473 = vpack.c.b16 %v371, %v370
    %v474 = vpack.c.b16 %v373, %v372
    %v475 = vpack.c.b16 %v375, %v374
    %v476 = vpack.c.b16 %v377, %v376
    %v477 = vpack.c.b16 %v379, %v378
    %v478 = vpack.c.b16 %v381, %v380
    %v479 = vpack.c.b16 %v383, %v382
    %v480 = vpack.c.b16 %v385, %v384
    %v481 = vpack.c.b16 %v387, %v386
    %v482 = vpack.c.b16 %v389, %v388
    %v483 = vpack.c.b16 %v391, %v390
    %v484 = vpack.c.b16 %v393, %v392
    %v485 = vpack.c.b16 %v395, %v394
    %v486 = vpack.c.b16 %v397, %v396
    %v487 = vpack.c.b16 %v399, %v398
    %v488 = vpack.c.b16 %v401, %v400
    %v489 = vpack.c.b16 %v403, %v402
    %v490 = vpack.c.b16 %v405, %v404
    %v491 = vpack.c.b16 %v407, %v406
    %v492 = vpack.c.b16 %v409, %v408
    %v493 = vpack.c.b16 %v411, %v410
    %v494 = vpack.c.b16 %v413, %v412
    %v495 = vpack.c.b16 %v415, %v414
    %v496 = vpack.c.b16 %v417, %v416
    %v497 = vpack.c.b16 %v419, %v418
    %v498 = vpack.c.b16 %v421, %v420
    %v499 = vpack.c.b16 %v423, %v422
    %v500 = vpack.c.b16 %v425, %v424
    %v501 = vpack.c.b16 %v427, %v426
    %v502 = vpack.c.b16 %v429, %v428
    %v503 = vpack.c.b16 %v431, %v430
    %v504 = vpack.c.b16 %v433, %v432
    %v505 = vpack.c.b16 %v435, %v434
    %v506 = vpack.c.b16 %v437, %v436
    %v507 = vpack.c.b16 %v439, %v438
    %v508 = vpack.c.b16 %v441, %v440
    %v509 = vpack.c.b16 %v443, %v442
    %v510 = vpack.c.b16 %v445, %v444
    %v511 = vpack.c.b16 %v447, %v446
    %576 = vmatprep.subr.bf16.mxu0 0
    %577 = vmatpush1.bf16.msra.mxu0 %v455
    %578 = vmatprep.subr.bf16.mxu0 0
    %579 = vmatpush1.bf16.msra.mxu0 %v454
    %580 = vmatprep.subr.bf16.mxu0 0
    %581 = vmatpush1.bf16.msra.mxu0 %v453
    %582 = vmatprep.subr.bf16.mxu0 0
    %583 = vmatpush1.bf16.msra.mxu0 %v452
    %584 = vmatprep.subr.bf16.mxu0 0
    %585 = vmatpush1.bf16.msra.mxu0 %v451
    %586 = vmatprep.subr.bf16.mxu0 0
    %587 = vmatpush1.bf16.msra.mxu0 %v450
    %588 = vmatprep.subr.bf16.mxu0 0
    %589 = vmatpush1.bf16.msra.mxu0 %v449
    %590 = vmatprep.subr.bf16.mxu0 0
    %591 = vmatpush1.bf16.msra.mxu0 %v448
    %592 = vmatprep.subr.bf16.mxu0 0
    %593 = vmatpush2.bf16.msra.mxu0 %v463
    %594 = vmatprep.subr.bf16.mxu0 0
    %595 = vmatpush2.bf16.msra.mxu0 %v462
    %596 = vmatprep.subr.bf16.mxu0 0
    %597 = vmatpush2.bf16.msra.mxu0 %v461
    %598 = vmatprep.subr.bf16.mxu0 0
    %599 = vmatpush2.bf16.msra.mxu0 %v460
    %600 = vmatprep.subr.bf16.mxu0 0
    %601 = vmatpush2.bf16.msra.mxu0 %v459
    %602 = vmatprep.subr.bf16.mxu0 0
    %603 = vmatpush2.bf16.msra.mxu0 %v458
    %604 = vmatprep.subr.bf16.mxu0 0
    %605 = vmatpush2.bf16.msra.mxu0 %v457
    %606 = vmatprep.subr.bf16.mxu0 0
    %607 = vmatpush2.bf16.msra.mxu0 %v456
    %608 = vmatprep.mubr.bf16.mxu0 %v177
    %609 = vmatmul.mubr.bf16.gmra.mxu0 %v176
    %v610 = vpop.f32.mrf.mxu0
    %v611 = vadd.f32 0.0, %v610
    %v612 = vpop.f32.mrf.mxu0
    %v613 = vpop.f32.mrf.mxu0
    %v614 = vpop.f32.mrf.mxu0
    %615 = vdwg.mxu0
    %616 = vmatprep.subr.bf16.mxu0 0
    %617 = vmatpush1.bf16.msra.mxu0 %v471
    %618 = vmatprep.subr.bf16.mxu0 0
    %619 = vmatpush1.bf16.msra.mxu0 %v470
    %620 = vmatprep.subr.bf16.mxu0 0
    %621 = vmatpush1.bf16.msra.mxu0 %v469
    %622 = vmatprep.subr.bf16.mxu0 0
    %623 = vmatpush1.bf16.msra.mxu0 %v468
    %624 = vmatprep.subr.bf16.mxu0 0
    %625 = vmatpush1.bf16.msra.mxu0 %v467
    %626 = vmatprep.subr.bf16.mxu0 0
    %627 = vmatpush1.bf16.msra.mxu0 %v466
    %628 = vmatprep.subr.bf16.mxu0 0
    %629 = vmatpush1.bf16.msra.mxu0 %v465
    %630 = vmatprep.subr.bf16.mxu0 0
    %631 = vmatpush1.bf16.msra.mxu0 %v464
    %632 = vmatprep.subr.bf16.mxu0 0
    %633 = vmatpush2.bf16.msra.mxu0 %v479
    %634 = vmatprep.subr.bf16.mxu0 0
    %635 = vmatpush2.bf16.msra.mxu0 %v478
    %636 = vmatprep.subr.bf16.mxu0 0
    %637 = vmatpush2.bf16.msra.mxu0 %v477
    %638 = vmatprep.subr.bf16.mxu0 0
    %639 = vmatpush2.bf16.msra.mxu0 %v476
    %640 = vmatprep.subr.bf16.mxu0 0
    %641 = vmatpush2.bf16.msra.mxu0 %v475
    %642 = vmatprep.subr.bf16.mxu0 0
    %643 = vmatpush2.bf16.msra.mxu0 %v474
    %644 = vmatprep.subr.bf16.mxu0 0
    %645 = vmatpush2.bf16.msra.mxu0 %v473
    %646 = vmatprep.subr.bf16.mxu0 0
    %647 = vmatpush2.bf16.msra.mxu0 %v472
    %648 = vmatprep.mubr.bf16.mxu0 %v179
    %649 = vmatmul.mubr.bf16.gmra.mxu0 %v178
    %v650 = vpop.f32.mrf.mxu0
    %v651 = vadd.f32 %v611, %v650
    %v652 = vpop.f32.mrf.mxu0
    %v653 = vpop.f32.mrf.mxu0
    %v654 = vpop.f32.mrf.mxu0
    %655 = vdwg.mxu0
    %656 = vmatprep.subr.bf16.mxu0 0
    %657 = vmatpush1.bf16.msra.mxu0 %v487
    %658 = vmatprep.subr.bf16.mxu0 0
    %659 = vmatpush1.bf16.msra.mxu0 %v486
    %660 = vmatprep.subr.bf16.mxu0 0
    %661 = vmatpush1.bf16.msra.mxu0 %v485
    %662 = vmatprep.subr.bf16.mxu0 0
    %663 = vmatpush1.bf16.msra.mxu0 %v484
    %664 = vmatprep.subr.bf16.mxu0 0
    %665 = vmatpush1.bf16.msra.mxu0 %v483
    %666 = vmatprep.subr.bf16.mxu0 0
    %667 = vmatpush1.bf16.msra.mxu0 %v482
    %668 = vmatprep.subr.bf16.mxu0 0
    %669 = vmatpush1.bf16.msra.mxu0 %v481
    %670 = vmatprep.subr.bf16.mxu0 0
    %671 = vmatpush1.bf16.msra.mxu0 %v480
    %672 = vmatprep.subr.bf16.mxu0 0
    %673 = vmatpush2.bf16.msra.mxu0 %v495
    %674 = vmatprep.subr.bf16.mxu0 0
    %675 = vmatpush2.bf16.msra.mxu0 %v494
    %676 = vmatprep.subr.bf16.mxu0 0
    %677 = vmatpush2.bf16.msra.mxu0 %v493
    %678 = vmatprep.subr.bf16.mxu0 0
    %679 = vmatpush2.bf16.msra.mxu0 %v492
    %680 = vmatprep.subr.bf16.mxu0 0
    %681 = vmatpush2.bf16.msra.mxu0 %v491
    %682 = vmatprep.subr.bf16.mxu0 0
    %683 = vmatpush2.bf16.msra.mxu0 %v490
    %684 = vmatprep.subr.bf16.mxu0 0
    %685 = vmatpush2.bf16.msra.mxu0 %v489
    %686 = vmatprep.subr.bf16.mxu0 0
    %687 = vmatpush2.bf16.msra.mxu0 %v488
    %688 = vmatprep.mubr.bf16.mxu0 %v181
    %689 = vmatmul.mubr.bf16.gmra.mxu0 %v180
    %v690 = vpop.f32.mrf.mxu0
    %v691 = vadd.f32 %v651, %v690
    %v692 = vpop.f32.mrf.mxu0
    %v693 = vpop.f32.mrf.mxu0
    %v694 = vpop.f32.mrf.mxu0
    %695 = vdwg.mxu0
    %696 = vmatprep.subr.bf16.mxu0 0
    %697 = vmatpush1.bf16.msra.mxu0 %v503
    %698 = vmatprep.subr.bf16.mxu0 0
    %699 = vmatpush1.bf16.msra.mxu0 %v502
    %700 = vmatprep.subr.bf16.mxu0 0
    %701 = vmatpush1.bf16.msra.mxu0 %v501
    %702 = vmatprep.subr.bf16.mxu0 0
    %703 = vmatpush1.bf16.msra.mxu0 %v500
    %704 = vmatprep.subr.bf16.mxu0 0
    %705 = vmatpush1.bf16.msra.mxu0 %v499
    %706 = vmatprep.subr.bf16.mxu0 0
    %707 = vmatpush1.bf16.msra.mxu0 %v498
    %708 = vmatprep.subr.bf16.mxu0 0
    %709 = vmatpush1.bf16.msra.mxu0 %v497
    %710 = vmatprep.subr.bf16.mxu0 0
    %711 = vmatpush1.bf16.msra.mxu0 %v496
    %712 = vmatprep.subr.bf16.mxu0 0
    %713 = vmatpush2.bf16.msra.mxu0 %v511
    %714 = vmatprep.subr.bf16.mxu0 0
    %715 = vmatpush2.bf16.msra.mxu0 %v510
    %716 = vmatprep.subr.bf16.mxu0 0
    %717 = vmatpush2.bf16.msra.mxu0 %v509
    %718 = vmatprep.subr.bf16.mxu0 0
    %719 = vmatpush2.bf16.msra.mxu0 %v508
    %720 = vmatprep.subr.bf16.mxu0 0
    %721 = vmatpush2.bf16.msra.mxu0 %v507
    %722 = vmatprep.subr.bf16.mxu0 0
    %723 = vmatpush2.bf16.msra.mxu0 %v506
    %724 = vmatprep.subr.bf16.mxu0 0
    %725 = vmatpush2.bf16.msra.mxu0 %v505
    %726 = vmatprep.subr.bf16.mxu0 0
    %727 = vmatpush2.bf16.msra.mxu0 %v504
    %728 = vmatprep.mubr.bf16.mxu0 %v183
    %729 = vmatmul.mubr.bf16.gmra.mxu0 %v182
    %v730 = vpop.f32.mrf.mxu0
    %v731 = vadd.f32 %v691, %v730
    %v732 = vpop.f32.mrf.mxu0
    %v733 = vpop.f32.mrf.mxu0
    %v734 = vpop.f32.mrf.mxu0
    %735 = vdwg.mxu0
    %v736 = vmax.f32 %v731, 0.0
    %v737 = vpack.c.bf16 %v736, %v736
    %v738 = vld [vmem:[%s2] sm:$0xf]
    %v739 = vld [vmem:[%s2 + $0x4] sm:$0xf]
    %v740 = vld [vmem:[%s2 + $0x8] sm:$0xf]
    %v741 = vld [vmem:[%s2 + $0xc] sm:$0xf]
    %v742 = vld [vmem:[%s2 + $0x10] sm:$0xf]
    %v743 = vld [vmem:[%s2 + $0x14] sm:$0xf]
    %v744 = vld [vmem:[%s2 + $0x18] sm:$0xf]
    %v745 = vld [vmem:[%s2 + $0x1c] sm:$0xf]
    %v746 = vld [vmem:[%s2 + $0x20] sm:$0xf]
    %v747 = vld [vmem:[%s2 + $0x24] sm:$0xf]
    %v748 = vld [vmem:[%s2 + $0x28] sm:$0xf]
    %v749 = vld [vmem:[%s2 + $0x2c] sm:$0xf]
    %v750 = vld [vmem:[%s2 + $0x30] sm:$0xf]
    %v751 = vld [vmem:[%s2 + $0x34] sm:$0xf]
    %v752 = vld [vmem:[%s2 + $0x38] sm:$0xf]
    %v753 = vld [vmem:[%s2 + $0x3c] sm:$0xf]
    %v770 = vunpack.c.l.b16 %v738
    %v771 = vunpack.c.l.b16 %v739
    %v772 = vunpack.c.l.b16 %v740
    %v773 = vunpack.c.l.b16 %v741
    %v774 = vunpack.c.l.b16 %v742
    %v775 = vunpack.c.l.b16 %v743
    %v776 = vunpack.c.l.b16 %v744
    %v777 = vunpack.c.l.b16 %v745
    %v778 = vunpack.c.l.b16 %v746
    %v779 = vunpack.c.l.b16 %v747
    %v780 = vunpack.c.l.b16 %v748
    %v781 = vunpack.c.l.b16 %v749
    %v782 = vunpack.c.l.b16 %v750
    %v783 = vunpack.c.l.b16 %v751
    %v784 = vunpack.c.l.b16 %v752
    %v785 = vunpack.c.l.b16 %v753
    %v786 = vpack.c.b16 %v771, %v770
    %v787 = vpack.c.b16 %v773, %v772
    %v788 = vpack.c.b16 %v775, %v774
    %v789 = vpack.c.b16 %v777, %v776
    %v790 = vpack.c.b16 %v779, %v778
    %v791 = vpack.c.b16 %v781, %v780
    %v792 = vpack.c.b16 %v783, %v782
    %v793 = vpack.c.b16 %v785, %v784
    %802 = vmatprep.subr.bf16.mxu0 0
    %803 = vmatpush1.bf16.msra.mxu0 %v793
    %804 = vmatprep.subr.bf16.mxu0 0
    %805 = vmatpush1.bf16.msra.mxu0 %v792
    %806 = vmatprep.subr.bf16.mxu0 0
    %807 = vmatpush1.bf16.msra.mxu0 %v791
    %808 = vmatprep.subr.bf16.mxu0 0
    %809 = vmatpush1.bf16.msra.mxu0 %v790
    %810 = vmatprep.subr.bf16.mxu0 0
    %811 = vmatpush1.bf16.msra.mxu0 %v789
    %812 = vmatprep.subr.bf16.mxu0 0
    %813 = vmatpush1.bf16.msra.mxu0 %v788
    %814 = vmatprep.subr.bf16.mxu0 0
    %815 = vmatpush1.bf16.msra.mxu0 %v787
    %816 = vmatprep.subr.bf16.mxu0 0
    %817 = vmatpush1.bf16.msra.mxu0 %v786
    %818 = vmatprep.subr.bf16.mxu0 0
    %819 = vmatpush2.bf16.msra.mxu0 0
    %820 = vmatprep.subr.bf16.mxu0 0
    %821 = vmatpush2.bf16.msra.mxu0 0
    %822 = vmatprep.subr.bf16.mxu0 0
    %823 = vmatpush2.bf16.msra.mxu0 0
    %824 = vmatprep.subr.bf16.mxu0 0
    %825 = vmatpush2.bf16.msra.mxu0 0
    %826 = vmatprep.subr.bf16.mxu0 0
    %827 = vmatpush2.bf16.msra.mxu0 0
    %828 = vmatprep.subr.bf16.mxu0 0
    %829 = vmatpush2.bf16.msra.mxu0 0
    %830 = vmatprep.subr.bf16.mxu0 0
    %831 = vmatpush2.bf16.msra.mxu0 0
    %832 = vmatprep.subr.bf16.mxu0 0
    %833 = vmatpush2.bf16.msra.mxu0 0
    %834 = vmatprep.mubr.bf16.mxu0 0
    %835 = vmatmul.mubr.bf16.gmra.mxu0 %v737
    %v836 = vpop.f32.mrf.mxu0
    %v837 = vadd.f32 0.0, %v836
    %v838 = vpop.f32.mrf.mxu0
    %v839 = vpop.f32.mrf.mxu0
    %v840 = vpop.f32.mrf.mxu0
    %841 = vdwg.mxu0
    %v842 = vmax.f32 %v837, 0.0
    %v843 = vpack.c.bf16 %v842, %v842
    %v844 = vld [vmem:[%s3] sm:$0xf]
    %v845 = vld [vmem:[%s3 + $0x4] sm:$0xf]
    %v846 = vld [vmem:[%s3 + $0x8] sm:$0xf]
    %v847 = vld [vmem:[%s3 + $0xc] sm:$0xf]
    %v848 = vld [vmem:[%s3 + $0x10] sm:$0xf]
    %v849 = vld [vmem:[%s3 + $0x14] sm:$0xf]
    %v850 = vld [vmem:[%s3 + $0x18] sm:$0xf]
    %v851 = vld [vmem:[%s3 + $0x1c] sm:$0xf]
    %v852 = vld [vmem:[%s3 + $0x20] sm:$0xf]
    %v853 = vld [vmem:[%s3 + $0x24] sm:$0xf]
    %v854 = vld [vmem:[%s3 + $0x28] sm:$0xf]
    %v855 = vld [vmem:[%s3 + $0x2c] sm:$0xf]
    %v856 = vld [vmem:[%s3 + $0x30] sm:$0xf]
    %v857 = vld [vmem:[%s3 + $0x34] sm:$0xf]
    %v858 = vld [vmem:[%s3 + $0x38] sm:$0xf]
    %v859 = vld [vmem:[%s3 + $0x3c] sm:$0xf]
    %v876 = vunpack.c.l.b16 %v844
    %v877 = vunpack.c.l.b16 %v845
    %v878 = vunpack.c.l.b16 %v846
    %v879 = vunpack.c.l.b16 %v847
    %v880 = vunpack.c.l.b16 %v848
    %v881 = vunpack.c.l.b16 %v849
    %v882 = vunpack.c.l.b16 %v850
    %v883 = vunpack.c.l.b16 %v851
    %v884 = vunpack.c.l.b16 %v852
    %v885 = vunpack.c.l.b16 %v853
    %v886 = vunpack.c.l.b16 %v854
    %v887 = vunpack.c.l.b16 %v855
    %v888 = vunpack.c.l.b16 %v856
    %v889 = vunpack.c.l.b16 %v857
    %v890 = vunpack.c.l.b16 %v858
    %v891 = vunpack.c.l.b16 %v859
    %v892 = vpack.c.b16 %v877, %v876
    %v893 = vpack.c.b16 %v879, %v878
    %v894 = vpack.c.b16 %v881, %v880
    %v895 = vpack.c.b16 %v883, %v882
    %v896 = vpack.c.b16 %v885, %v884
    %v897 = vpack.c.b16 %v887, %v886
    %v898 = vpack.c.b16 %v889, %v888
    %v899 = vpack.c.b16 %v891, %v890
    %908 = vmatprep.subr.bf16.mxu0 0
    %909 = vmatpush1.bf16.msra.mxu0 %v899
    %910 = vmatprep.subr.bf16.mxu0 0
    %911 = vmatpush1.bf16.msra.mxu0 %v898
    %912 = vmatprep.subr.bf16.mxu0 0
    %913 = vmatpush1.bf16.msra.mxu0 %v897
    %914 = vmatprep.subr.bf16.mxu0 0
    %915 = vmatpush1.bf16.msra.mxu0 %v896
    %916 = vmatprep.subr.bf16.mxu0 0
    %917 = vmatpush1.bf16.msra.mxu0 %v895
    %918 = vmatprep.subr.bf16.mxu0 0
    %919 = vmatpush1.bf16.msra.mxu0 %v894
    %920 = vmatprep.subr.bf16.mxu0 0
    %921 = vmatpush1.bf16.msra.mxu0 %v893
    %922 = vmatprep.subr.bf16.mxu0 0
    %923 = vmatpush1.bf16.msra.mxu0 %v892
    %924 = vmatprep.subr.bf16.mxu0 0
    %925 = vmatpush2.bf16.msra.mxu0 0
    %926 = vmatprep.subr.bf16.mxu0 0
    %927 = vmatpush2.bf16.msra.mxu0 0
    %928 = vmatprep.subr.bf16.mxu0 0
    %929 = vmatpush2.bf16.msra.mxu0 0
    %930 = vmatprep.subr.bf16.mxu0 0
    %931 = vmatpush2.bf16.msra.mxu0 0
    %932 = vmatprep.subr.bf16.mxu0 0
    %933 = vmatpush2.bf16.msra.mxu0 0
    %934 = vmatprep.subr.bf16.mxu0 0
    %935 = vmatpush2.bf16.msra.mxu0 0
    %936 = vmatprep.subr.bf16.mxu0 0
    %937 = vmatpush2.bf16.msra.mxu0 0
    %938 = vmatprep.subr.bf16.mxu0 0
    %939 = vmatpush2.bf16.msra.mxu0 0
    %940 = vmatprep.mubr.bf16.mxu0 0
    %941 = vmatmul.mubr.bf16.gmra.mxu0 %v843
    %v942 = vpop.f32.mrf.mxu0
    %v943 = vadd.f32 0.0, %v942
    %v944 = vpop.f32.mrf.mxu0
    %v945 = vpop.f32.mrf.mxu0
    %v946 = vpop.f32.mrf.mxu0
    %947 = vdwg.mxu0
    %948 = vst [vmem:[%s4] sm:$0xff] %v943
    // Predicated region
    $region22: #{_forward_impl.1} parent=1 // pred_check
      _
    $region23: #{_forward_impl.1} parent=1 // pred_check_branch
      %950 = sbr.rel (0) target = $region25
    $region24: #{_forward_impl.1} parent=1 // pred_region
      _
    $region25: #{_forward_impl.1} parent=1 // pred_fallthru
      _
    // Predicated region
    $region26: #{_forward_impl.1} parent=1 // pred_check
      _
    $region27: #{_forward_impl.1} parent=1 // pred_check_branch
      %952 = sbr.rel (0) target = $region29
    $region28: #{_forward_impl.1} parent=1 // pred_region
      _
    $region29: #{_forward_impl.1} parent=1 // pred_fallthru
      _
    %953 = vsyncpa [#allocation3], 1

</llo_original>
